<compile_context>
chip_gen: v7x
topology: tpu7x:2x2x1
jax: 0.10.0
libtpu: 0.0.40
codegen_flags: <defaults>
</compile_context>

<pallas_src>
import functools

import jax
import jax.numpy as jnp
from jax import lax
from jax.experimental import pallas as pl
from jax.experimental.pallas import tpu as pltpu


def _round_up(x, m):
    return -(-x // m) * m


def _round_down_multiple(x, m):
    return max(m, (x // m) * m)


def _vmem_budget_bytes():
    """Generation-aware scoped-VMEM budget: ~3/4 of physical, capped at 100 MiB."""
    cap = None
    try:
        cap = getattr(pltpu.get_tpu_info(), "vmem_capacity_bytes", None)
    except Exception:
        cap = None
    if not cap:
        cap = 64 * 1024 * 1024          # conservative fallback (v7x physical VMEM)
    return min((int(cap) * 3) // 4, 100 * 1024 * 1024)


def _num_tensorcores():
    """Best-effort TensorCores-per-device (v7x megacore = 2); default 1."""
    try:
        info = pltpu.get_tpu_info()
        for attr in ("num_cores", "core_count", "num_tensorcores"):
            v = getattr(info, attr, None)
            if v:
                return int(v)
    except Exception:
        pass
    try:
        v = getattr(jax.devices()[0], "num_cores", None)
        if v:
            return int(v)
    except Exception:
        pass
    return 1


# ---------------------------------------------------------------------------
# Shared gate math: pooled (C, 1) f32 -> gate (C, 1) f32, two tiny FCs on VPU/XLU.
#   fc1 weight W1: (Cr, C)  -> passed transposed as w1t (C, Cr)
#   fc2 weight W2: (C, Cr)  -> passed as-is
# ---------------------------------------------------------------------------
def _gate_from_pooled(pooled, w1t, b1, w2, b2):
    # h_j = relu( sum_c W1[j, c] * pooled_c + b1_j )            -> (1, Cr)
    h = jnp.maximum(jnp.sum(w1t * pooled, axis=0, keepdims=True) + b1, 0.0)
    # g_c = sigmoid( sum_j W2[c, j] * h_j + b2_c )               -> (C, 1)
    return jax.nn.sigmoid(jnp.sum(w2 * h, axis=1, keepdims=True) + b2)


# ---------------------------------------------------------------------------
# Fused single-pass kernel: one grid step per batch element, full (C, HW) slab.
# x is read from HBM exactly once.
# ---------------------------------------------------------------------------
def _gate_fused_kernel(x_ref, w1t_ref, b1_ref, w2_ref, b2_ref,
                       o1_ref, o2_ref, g_ref, *, inv_hw):
    x = x_ref[0]                                                   # (C, HW), native dtype
    pooled = jnp.sum(x.astype(jnp.float32), axis=1, keepdims=True) * inv_hw
    g = _gate_from_pooled(pooled, w1t_ref[...], b1_ref[...],
                          w2_ref[...], b2_ref[...])                # (C, 1) f32
    g_ref[0] = g.astype(g_ref.dtype)
    o1 = x * g.astype(x.dtype)
    o1_ref[0] = o1
    o2_ref[0] = x - o1                                             # == x * (1 - g)


# ---------------------------------------------------------------------------
# Tiled two-pass scheme for large H*W (or small batch on multi-TC chips).
# Pass 1: accumulate per-channel sums over HW tiles (tail masked, no padding),
#         compute gate on the last tile.
# ---------------------------------------------------------------------------
def _gate_reduce_kernel(x_ref, w1t_ref, b1_ref, w2_ref, b2_ref,
                        g_ref, acc_ref, *, inv_hw, hw, t_hw):
    t = pl.program_id(1)

    @pl.when(t == 0)
    def _():
        acc_ref[...] = jnp.zeros_like(acc_ref)

    x = x_ref[0].astype(jnp.float32)                               # (C, t_hw)
    if hw % t_hw != 0:
        # Mask the out-of-bounds tail lanes of the partial last block.
        lane = lax.broadcasted_iota(jnp.int32, x.shape, 1)
        x = jnp.where(lane + t * t_hw < hw, x, 0.0)
    acc_ref[...] += jnp.sum(x, axis=1, keepdims=True)

    @pl.when(t == pl.num_programs(1) - 1)
    def _():
        pooled = acc_ref[...] * inv_hw                             # divide by true HW
        g = _gate_from_pooled(pooled, w1t_ref[...], b1_ref[...],
                              w2_ref[...], b2_ref[...])
        g_ref[0] = g.astype(g_ref.dtype)


# Pass 2: apply the gate with lane-dense tiles (partial last block store is masked
# by the pipeline; nothing is written out of bounds).
def _gate_apply_kernel(x_ref, g_ref, o1_ref, o2_ref):
    x = x_ref[0]                     # (C, t_hw), native dtype
    g = g_ref[0].astype(x.dtype)     # (C, 1)
    o1 = x * g
    o1_ref[0] = o1
    o2_ref[0] = x - o1


# ---------------------------------------------------------------------------
# Wrapper: ChannelGate_sub.forward
# ---------------------------------------------------------------------------
def channel_gate(x, params, *, tile_hw=2048, fused_block_bytes=None):
    """Returns (x * g, x * (1 - g), g) with g of shape (N, C, 1, 1), all in x.dtype."""
    N, C, H, W = x.shape
    HW = H * W
    Cr = int(params['fc1_b'].shape[0])
    dtype = x.dtype
    itemsize = int(jnp.dtype(dtype).itemsize)

    budget = _vmem_budget_bytes()
    if fused_block_bytes is None:
        # Fused path keeps ~6 (double-buffered in/out) copies of the (C, HW) slab in VMEM;
        # use budget/8 to leave headroom for weights and compute temporaries.
        fused_block_bytes = budget // 8

    x3 = x.reshape(N, C, HW)                                       # native dtype, no copy-cast
    w1t = params['fc1_w'].reshape(Cr, C).T.astype(jnp.float32)     # (C, Cr)
    b1 = params['fc1_b'].reshape(1, Cr).astype(jnp.float32)
    w2 = params['fc2_w'].reshape(C, Cr).astype(jnp.float32)        # (C, Cr)
    b2 = params['fc2_b'].reshape(C, 1).astype(jnp.float32)
    inv_hw = 1.0 / float(HW)

    weight_specs = [
        pl.BlockSpec((C, Cr), lambda *_: (0, 0)),
        pl.BlockSpec((1, Cr), lambda *_: (0, 0)),
        pl.BlockSpec((C, Cr), lambda *_: (0, 0)),
        pl.BlockSpec((C, 1), lambda *_: (0, 0)),
    ]

    slab_bytes = C * HW * itemsize
    num_tc = _num_tensorcores()
    # Prefer the two-pass path when batch can't feed every TensorCore (v7x megacore):
    # its apply pass parallelizes over HW tiles as well.
    use_fused = (slab_bytes <= fused_block_bytes) and (N >= num_tc)

    # ---- fused single-pass path (x read from HBM exactly once) ----
    if use_fused:
        # TODO(synk): if HW % 128 != 0 the fused output stores are lane-masked (vst.msk);
        #             still single-HBM-read so left as-is.
        o1, o2, g = pl.pallas_call(
            functools.partial(_gate_fused_kernel, inv_hw=inv_hw),
            out_shape=(jax.ShapeDtypeStruct((N, C, HW), dtype),
                       jax.ShapeDtypeStruct((N, C, HW), dtype),
                       jax.ShapeDtypeStruct((N, C, 1), dtype)),
            grid=(N,),
            in_specs=[pl.BlockSpec((1, C, HW), lambda n: (n, 0, 0))] + weight_specs,
            out_specs=(pl.BlockSpec((1, C, HW), lambda n: (n, 0, 0)),
                       pl.BlockSpec((1, C, HW), lambda n: (n, 0, 0)),
                       pl.BlockSpec((1, C, 1), lambda n: (n, 0, 0))),
            compiler_params=pltpu.CompilerParams(
                dimension_semantics=("parallel",),
                vmem_limit_bytes=budget),
            cost_estimate=pl.CostEstimate(
                flops=int(3 * N * C * HW + 4 * N * C * Cr),
                transcendentals=int(N * C),
                bytes_accessed=int(3 * N * C * HW * itemsize + N * C * itemsize)),
        )(x3, w1t, b1, w2, b2)
        return (o1.reshape(N, C, H, W), o2.reshape(N, C, H, W),
                g.reshape(N, C, 1, 1))

    # ---- tiled two-pass path (large H*W or small batch on multi-TC) ----
    # Apply pass holds x + 2 outputs (double-buffered) -> ~6 tile copies in VMEM.
    t_apply_cap = _round_down_multiple(budget // (8 * C * itemsize), 128)
    t_hw_apply = max(128, min(_round_up(HW, 128), _round_up(tile_hw, 128), t_apply_cap))
    # Reduce pass only double-buffers x -> can use a larger tile.
    t_reduce_cap = _round_down_multiple(budget // (3 * C * itemsize), 128)
    t_hw_reduce = max(128, min(_round_up(HW, 128),
                               max(t_hw_apply, _round_up(4 * tile_hw, 128)),
                               t_reduce_cap))
    T_r = pl.cdiv(HW, t_hw_reduce)
    T_a = pl.cdiv(HW, t_hw_apply)

    g = pl.pallas_call(
        functools.partial(_gate_reduce_kernel, inv_hw=inv_hw, hw=HW, t_hw=t_hw_reduce),
        out_shape=jax.ShapeDtypeStruct((N, C, 1), dtype),
        grid=(N, T_r),
        in_specs=[pl.BlockSpec((1, C, t_hw_reduce), lambda n, t: (n, 0, t))] + weight_specs,
        out_specs=pl.BlockSpec((1, C, 1), lambda n, t: (n, 0, 0)),
        scratch_shapes=[pltpu.VMEM((C, 1), jnp.float32)],
        compiler_params=pltpu.CompilerParams(
            dimension_semantics=("parallel", "arbitrary"),
            vmem_limit_bytes=budget),
        cost_estimate=pl.CostEstimate(
            flops=int(N * C * HW + 4 * N * C * Cr),
            transcendentals=int(N * C),
            bytes_accessed=int(N * C * HW * itemsize + N * C * itemsize)),
    )(x3, w1t, b1, w2, b2)

    o1, o2 = pl.pallas_call(
        _gate_apply_kernel,
        out_shape=(jax.ShapeDtypeStruct((N, C, HW), dtype),
                   jax.ShapeDtypeStruct((N, C, HW), dtype)),
        grid=(N, T_a),
        in_specs=[pl.BlockSpec((1, C, t_hw_apply), lambda n, t: (n, 0, t)),
                  pl.BlockSpec((1, C, 1), lambda n, t: (n, 0, 0))],
        out_specs=(pl.BlockSpec((1, C, t_hw_apply), lambda n, t: (n, 0, t)),
                   pl.BlockSpec((1, C, t_hw_apply), lambda n, t: (n, 0, t))),
        compiler_params=pltpu.CompilerParams(
            dimension_semantics=("parallel", "parallel"),
            vmem_limit_bytes=budget),
        cost_estimate=pl.CostEstimate(
            flops=int(2 * N * C * HW),
            transcendentals=0,
            bytes_accessed=int(3 * N * C * HW * itemsize + N * C * itemsize)),
    )(x3, g)

    return (o1.reshape(N, C, H, W), o2.reshape(N, C, H, W),
            g.reshape(N, C, 1, 1))


# ---------------------------------------------------------------------------
# Pure-JAX reference (mirrors the PyTorch forward) for a correctness check.
# ---------------------------------------------------------------------------
def channel_gate_ref(x, params):
    N, C, H, W = x.shape
    Cr = params['fc1_b'].shape[0]
    pooled = jnp.mean(x.astype(jnp.float32), axis=(2, 3))               # (N, C)
    h = jnp.maximum(pooled @ params['fc1_w'].reshape(Cr, C).T
                    + params['fc1_b'], 0.0)                             # (N, Cr)
    g = jax.nn.sigmoid(h @ params['fc2_w'].reshape(C, Cr).T
                       + params['fc2_b'])                               # (N, C)
    g4 = g.reshape(N, C, 1, 1).astype(x.dtype)
    return x * g4, x * (1.0 - g4), g4


if __name__ == "__main__":
    key = jax.random.PRNGKey(0)
    kx, kx2, k1, k2, k3, k4 = jax.random.split(key, 6)

    reduction = 16
    N, C = 2, 128
    Cr = C // reduction

    params = {
        'fc1_w': 0.1 * jax.random.normal(k1, (Cr, C), dtype=jnp.float32),
        'fc1_b': 0.1 * jax.random.normal(k2, (Cr,), dtype=jnp.float32),
        'fc2_w': 0.1 * jax.random.normal(k3, (C, Cr), dtype=jnp.float32),
        'fc2_b': 0.1 * jax.random.normal(k4, (C,), dtype=jnp.float32),
    }

    # Case 1: lane-dense spatial map (16x16 -> HW=256).
    x_a = jax.random.normal(kx, (N, C, 16, 16), dtype=jnp.float32)
    # Case 2: non-multiple-of-128 spatial map (15x15 -> HW=225): exercises the
    # masked tail in the tiled path and masked stores in the fused path.
    x_b = jax.random.normal(kx2, (N, C, 15, 15), dtype=jnp.float32)

    results = []
    for x in (x_a, x_b):
        want = channel_gate_ref(x, params)
        got_auto = channel_gate(x, params)                                   # fused path
        got_tiled = channel_gate(x, params, tile_hw=128, fused_block_bytes=0)  # force tiled
        results.append((got_auto, got_tiled, want))
    jax.block_until_ready(results)

    for got_auto, got_tiled, want in results:
        for got in (got_auto, got_tiled):
            for g_arr, r_arr in zip(got, want):
                assert g_arr.shape == r_arr.shape, (g_arr.shape, r_arr.shape)
                assert g_arr.dtype == r_arr.dtype, (g_arr.dtype, r_arr.dtype)
                assert bool(jnp.all(jnp.isfinite(g_arr)))
                err = float(jnp.max(jnp.abs(g_arr.astype(jnp.float32)
                                            - r_arr.astype(jnp.float32))))
                assert err < 1e-4, err

    print("KERNEL_OK")
</pallas_src>

<mosaic_0001>
module attributes {stable_mosaic.version = 11 : i64} {
  func.func @_gate_fused_kernel(%arg0: i32, %arg1: memref<1x128x256xf32, #tpu.memory_space<vmem>>, %arg2: memref<128x8xf32, #tpu.memory_space<vmem>>, %arg3: memref<1x8xf32, #tpu.memory_space<vmem>>, %arg4: memref<128x8xf32, #tpu.memory_space<vmem>>, %arg5: memref<128x1xf32, #tpu.memory_space<vmem>>, %arg6: memref<1x128x256xf32, #tpu.memory_space<vmem>>, %arg7: memref<1x128x256xf32, #tpu.memory_space<vmem>>, %arg8: memref<1x128x1xf32, #tpu.memory_space<vmem>>) attributes {dimension_semantics = [#tpu.dimension_semantics<parallel>], iteration_bounds = array<i64: 2>, scalar_prefetch = 0 : i64, scratch_operands = 0 : i64, tpu.core_type = #tpu.core_type<tc>, window_params = [{transform_indices = @transform_0, window_bounds = array<i64: 1, 128, 256>}, {pipeline_mode = #tpu.pipeline_mode<synchronous>, transform_indices = @transform_1, window_bounds = array<i64: 128, 8>}, {pipeline_mode = #tpu.pipeline_mode<synchronous>, transform_indices = @transform_2, window_bounds = array<i64: 1, 8>}, {pipeline_mode = #tpu.pipeline_mode<synchronous>, transform_indices = @transform_3, window_bounds = array<i64: 128, 8>}, {pipeline_mode = #tpu.pipeline_mode<synchronous>, transform_indices = @transform_4, window_bounds = array<i64: 128, 1>}, {transform_indices = @transform_5, window_bounds = array<i64: 1, 128, 256>}, {transform_indices = @transform_6, window_bounds = array<i64: 1, 128, 256>}, {transform_indices = @transform_7, window_bounds = array<i64: 1, 128, 1>}]} {
    %c0 = arith.constant 0 : index
    %c0_0 = arith.constant 0 : index
    %c0_1 = arith.constant 0 : index
    %0 = vector.load %arg1[%c0, %c0_0, %c0_1] : memref<1x128x256xf32, #tpu.memory_space<vmem>>, vector<1x128x256xf32>
    %1 = vector.shape_cast %0 : vector<1x128x256xf32> to vector<128x256xf32>
    %cst = arith.constant dense<0.000000e+00> : vector<128xf32>
    %2 = vector.multi_reduction <add>, %1, %cst [1] : vector<128x256xf32> to vector<128xf32>
    %3 = vector.shape_cast %2 : vector<128xf32> to vector<128x1xf32>
    %cst_2 = arith.constant 3.906250e-03 : f32
    %4 = vector.broadcast %cst_2 : f32 to vector<128x1xf32>
    %5 = arith.mulf %3, %4 : vector<128x1xf32>
    %c0_3 = arith.constant 0 : index
    %c0_4 = arith.constant 0 : index
    %6 = vector.load %arg2[%c0_3, %c0_4] : memref<128x8xf32, #tpu.memory_space<vmem>>, vector<128x8xf32>
    %c0_5 = arith.constant 0 : index
    %c0_6 = arith.constant 0 : index
    %7 = vector.load %arg3[%c0_5, %c0_6] : memref<1x8xf32, #tpu.memory_space<vmem>>, vector<1x8xf32>
    %c0_7 = arith.constant 0 : index
    %c0_8 = arith.constant 0 : index
    %8 = vector.load %arg4[%c0_7, %c0_8] : memref<128x8xf32, #tpu.memory_space<vmem>>, vector<128x8xf32>
    %c0_9 = arith.constant 0 : index
    %c0_10 = arith.constant 0 : index
    %9 = vector.load %arg5[%c0_9, %c0_10] : memref<128x1xf32, #tpu.memory_space<vmem>>, vector<128x1xf32>
    %10 = vector.broadcast %5 : vector<128x1xf32> to vector<128x8xf32>
    %11 = arith.mulf %6, %10 : vector<128x8xf32>
    %cst_11 = arith.constant dense<0.000000e+00> : vector<8xf32>
    %12 = vector.multi_reduction <add>, %11, %cst_11 [0] : vector<128x8xf32> to vector<8xf32>
    %13 = vector.shape_cast %12 : vector<8xf32> to vector<1x8xf32>
    %14 = arith.addf %13, %7 : vector<1x8xf32>
    %cst_12 = arith.constant 0.000000e+00 : f32
    %15 = vector.broadcast %cst_12 : f32 to vector<1x8xf32>
    %16 = arith.maximumf %14, %15 : vector<1x8xf32>
    %17 = vector.broadcast %16 : vector<1x8xf32> to vector<128x8xf32>
    %18 = arith.mulf %8, %17 : vector<128x8xf32>
    %cst_13 = arith.constant dense<0.000000e+00> : vector<128xf32>
    %19 = vector.multi_reduction <add>, %18, %cst_13 [1] : vector<128x8xf32> to vector<128xf32>
    %20 = vector.shape_cast %19 : vector<128xf32> to vector<128x1xf32>
    %21 = arith.addf %20, %9 : vector<128x1xf32>
    %22 = arith.negf %21 : vector<128x1xf32>
    %23 = math.exp %22 : vector<128x1xf32>
    %cst_14 = arith.constant 1.000000e+00 : f32
    %24 = vector.broadcast %cst_14 : f32 to vector<128x1xf32>
    %25 = arith.addf %24, %23 : vector<128x1xf32>
    %26 = arith.divf %24, %25 : vector<128x1xf32>
    %c0_15 = arith.constant 0 : index
    %c0_16 = arith.constant 0 : index
    %c0_17 = arith.constant 0 : index
    %27 = vector.load %arg8[%c0_15, %c0_16, %c0_17] : memref<1x128x1xf32, #tpu.memory_space<vmem>>, vector<1x128x1xf32>
    %28 = vector.shape_cast %27 : vector<1x128x1xf32> to vector<128x1xf32>
    %29 = vector.shape_cast %26 : vector<128x1xf32> to vector<1x128x1xf32>
    tpu.vector_store %arg8[%c0_15, %c0_16, %c0_17], %29 {strides = array<i32>} : memref<1x128x1xf32, #tpu.memory_space<vmem>>, vector<1x128x1xf32>,
    %30 = vector.broadcast %26 : vector<128x1xf32> to vector<128x256xf32>
    %31 = arith.mulf %1, %30 : vector<128x256xf32>
    %c0_18 = arith.constant 0 : index
    %c0_19 = arith.constant 0 : index
    %c0_20 = arith.constant 0 : index
    %32 = vector.load %arg6[%c0_18, %c0_19, %c0_20] : memref<1x128x256xf32, #tpu.memory_space<vmem>>, vector<1x128x256xf32>
    %33 = vector.shape_cast %32 : vector<1x128x256xf32> to vector<128x256xf32>
    %34 = vector.shape_cast %31 : vector<128x256xf32> to vector<1x128x256xf32>
    tpu.vector_store %arg6[%c0_18, %c0_19, %c0_20], %34 {strides = array<i32>} : memref<1x128x256xf32, #tpu.memory_space<vmem>>, vector<1x128x256xf32>,
    %35 = arith.subf %1, %31 : vector<128x256xf32>
    %c0_21 = arith.constant 0 : index
    %c0_22 = arith.constant 0 : index
    %c0_23 = arith.constant 0 : index
    %36 = vector.load %arg7[%c0_21, %c0_22, %c0_23] : memref<1x128x256xf32, #tpu.memory_space<vmem>>, vector<1x128x256xf32>
    %37 = vector.shape_cast %36 : vector<1x128x256xf32> to vector<128x256xf32>
    %38 = vector.shape_cast %35 : vector<128x256xf32> to vector<1x128x256xf32>
    tpu.vector_store %arg7[%c0_21, %c0_22, %c0_23], %38 {strides = array<i32>} : memref<1x128x256xf32, #tpu.memory_space<vmem>>, vector<1x128x256xf32>,
    return
  }
  func.func @transform_0(%arg0: i32) -> (i32, i32, i32) {
    %c0_i32 = arith.constant 0 : i32
    %c0_i32_0 = arith.constant 0 : i32
    %c0_i32_1 = arith.constant 0 : i32
    return %arg0, %c0_i32, %c0_i32_0 : i32, i32, i32
  }
  func.func @transform_1(%arg0: i32) -> (i32, i32) {
    %c0_i32 = arith.constant 0 : i32
    %c0_i32_0 = arith.constant 0 : i32
    %c0_i32_1 = arith.constant 0 : i32
    return %c0_i32, %c0_i32_0 : i32, i32
  }
  func.func @transform_2(%arg0: i32) -> (i32, i32) {
    %c0_i32 = arith.constant 0 : i32
    %c0_i32_0 = arith.constant 0 : i32
    %c0_i32_1 = arith.constant 0 : i32
    return %c0_i32, %c0_i32_0 : i32, i32
  }
  func.func @transform_3(%arg0: i32) -> (i32, i32) {
    %c0_i32 = arith.constant 0 : i32
    %c0_i32_0 = arith.constant 0 : i32
    %c0_i32_1 = arith.constant 0 : i32
    return %c0_i32, %c0_i32_0 : i32, i32
  }
  func.func @transform_4(%arg0: i32) -> (i32, i32) {
    %c0_i32 = arith.constant 0 : i32
    %c0_i32_0 = arith.constant 0 : i32
    %c0_i32_1 = arith.constant 0 : i32
    return %c0_i32, %c0_i32_0 : i32, i32
  }
  func.func @transform_5(%arg0: i32) -> (i32, i32, i32) {
    %c0_i32 = arith.constant 0 : i32
    %c0_i32_0 = arith.constant 0 : i32
    %c0_i32_1 = arith.constant 0 : i32
    return %arg0, %c0_i32, %c0_i32_0 : i32, i32, i32
  }
  func.func @transform_6(%arg0: i32) -> (i32, i32, i32) {
    %c0_i32 = arith.constant 0 : i32
    %c0_i32_0 = arith.constant 0 : i32
    %c0_i32_1 = arith.constant 0 : i32
    return %arg0, %c0_i32, %c0_i32_0 : i32, i32, i32
  }
  func.func @transform_7(%arg0: i32) -> (i32, i32, i32) {
    %c0_i32 = arith.constant 0 : i32
    %c0_i32_0 = arith.constant 0 : i32
    %c0_i32_1 = arith.constant 0 : i32
    return %arg0, %c0_i32, %c0_i32_0 : i32, i32, i32
  }
}

</mosaic_0001>

<llo_original>
// kernel: tpu_custom_call.1
$region0: #{tpu_custom_call.1}
  #allocation0 [shape = 'u32[]', space=smem, size = 0x4, offset = 0x4, fixed_abs, tag = 'smem constant byte address 0x4 - core index']
  #allocation1 [shape = 'u32[144,128]{1,0:T(1,128)}', space=vmem, size = 0x12000, scoped, tag = 'internal scratch']
  %s0 = inlined_call_operand.hbm [shape: f32[2,128,256], index: 0, kind: input, shape index: {}]
  %s1 = inlined_call_operand.vmem [shape: f32[128,8], index: 1, kind: input, shape index: {}]
  %s2 = inlined_call_operand.vmem [shape: f32[1,8], index: 2, kind: input, shape index: {}]
  %s3 = inlined_call_operand.vmem [shape: f32[128,8], index: 3, kind: input, shape index: {}]
  %s4 = inlined_call_operand.vmem [shape: f32[128,1], index: 4, kind: input, shape index: {}]
  %s5 = inlined_call_operand.hbm [shape: f32[2,128,256], index: 5, kind: output, shape index: {0}]
  %s6 = inlined_call_operand.hbm [shape: f32[2,128,256], index: 6, kind: output, shape index: {1}]
  %s7 = inlined_call_operand.vmem [shape: f32[2,128,1], index: 7, kind: output, shape index: {2}]
  %8 = xla_tuple %s5, %s6, %s7
  %s9 = sld [smem:[#allocation0]]
  $region73: #{tpu_custom_call.1} parent=0
    _
  %s11 = ssub.s32 1, %s9
  %s12 = scalar_select 0, %s11, %s9
  $region1: #{tpu_custom_call.1} parent=0
    #allocation2 [shape = 'u8[262144]{0}', space=vmem, size = 0x40000, scoped, tag = 'input window, operand 0']
    #allocation3 [shape = 's32[2]{0}', space=sflag, size = 0x8, scoped, tag = 'scoped memory for tpu_custom_call.1']
    #allocation4 [shape = 's32[2]{0}', space=sflag, size = 0x8, scoped, tag = 'scoped memory for tpu_custom_call.1']
    #allocation5 [shape = 'u8[262144]{0}', space=vmem, size = 0x40000, scoped, tag = 'output window, operand 0']
    #allocation6 [shape = 'u8[262144]{0}', space=vmem, size = 0x40000, scoped, tag = 'output window, operand 1']
    #allocation7 [shape = 's32[2]{0}', space=sflag, size = 0x8, scoped, tag = 'scoped memory for tpu_custom_call.1']
    %13 = vsyncpa [#allocation3], 0
    %s14 = scalar_lea.sflag [#allocation3], 1
    %15 = vsyncpa %s14, 0
    %16 = vsyncpa [#allocation4], 0
    %s17 = scalar_lea.sflag [#allocation4], 1
    %18 = vsyncpa %s17, 0
    %19 = vsyncpa [#allocation7], 0
    %s20 = scalar_lea.sflag [#allocation7], 1
    %21 = vsyncpa %s20, 0
    loop: start=0, step=1, limit=4
    $region2: #{tpu_custom_call.1} parent=1 // loop_pre_header
      _
    $region3: #{tpu_custom_call.1} parent=1 // loop_header
      %s23 = sphi 0, %s27
      %p24 = scmp.ge.s32.totalorder %s23, 4
      %s33 = sphi 0, %s35
      %s36 = sphi 0, %s33
      %s37 = sphi 0, %s36
      %s53 = sphi 0, %s37
      %s57 = sphi 0, %s57
      %s59 = sphi 0, %s57
      %s60 = sphi 0, %s59
      %s74 = sphi 0, %s60
      %s78 = sphi 0, %s78
      %s80 = sphi 0, %s78
      %s81 = sphi 0, %s80
      %s95 = sphi 0, %s81
      %s99 = sphi 0, %s99
      %s101 = sphi 0, %s99
      %s102 = sphi 0, %s101
      %s116 = sphi 0, %s102
      %s120 = sphi 0, %s120
      %s122 = sphi 0, %s120
      %s123 = sphi 0, %s122
      %s137 = sphi 0, %s123
      %s143 = sphi 0, %s145
      %s146 = sphi 0, %s143
      %s147 = sphi 0, %s146
      %s163 = sphi 0, %s147
      %s169 = sphi 0, %s171
      %s172 = sphi 0, %s169
      %s173 = sphi 0, %s172
      %s189 = sphi 0, %s173
      %s195 = sphi 0, %s197
      %s198 = sphi 0, %s195
      %s199 = sphi 0, %s198
      %s215 = sphi 0, %s199
    $region4: #{tpu_custom_call.1} parent=1 // loop_header_branch
      %26 = sbr.rel (%p24) target = $region8
    $region5: #{tpu_custom_call.1} parent=1 // loop_body
      %s28 = ssub.s32 %s23, 1
      %s29 = ssub.s32 %s23, 2
      %s30 = sadd.s32 %s23, 1
      %s31 = ssub.s32 %s23, %s30
      %p32 = scmp.eq.s32.totalorder %s31, 0
      %s34 = sadd.s32 %s33, 1
      %s35 = scalar_select %p32, %s33, %s34
      %p38 = pneg %p32
      %p39 = scmp.eq.s32.totalorder %s23, 1
      %p40 = por %p38, %p39
      %p41 = scmp.ne.s32.totalorder %s33, %s36
      %p42 = scmp.eq.s32.totalorder %s23, 0
      %p43 = por %p41, %p42
      %p44 = scmp.ne.s32.totalorder %s33, %s36
      %p45 = scmp.eq.s32.totalorder %s28, 1
      %p46 = por %p44, %p45
      %p47 = scmp.ne.s32.totalorder %s36, %s37
      %p48 = scmp.eq.s32.totalorder %s28, 0
      %p49 = por %p47, %p48
      %p50 = scmp.ne.s32.totalorder %s36, %s37
      %p51 = scmp.eq.s32.totalorder %s29, 1
      %p52 = por %p50, %p51
      %p54 = scmp.ne.s32.totalorder %s37, %s53
      %p55 = scmp.eq.s32.totalorder %s29, 0
      %p56 = por %p54, %p55
      %s58 = sadd.s32 %s57, 1
      %p61 = scmp.eq.s32.totalorder %s23, 1
      %p62 = scmp.ne.s32.totalorder %s57, %s59
      %p63 = scmp.eq.s32.totalorder %s23, 0
      %p64 = por %p62, %p63
      %p65 = scmp.ne.s32.totalorder %s57, %s59
      %p66 = scmp.eq.s32.totalorder %s28, 1
      %p67 = por %p65, %p66
      %p68 = scmp.ne.s32.totalorder %s59, %s60
      %p69 = scmp.eq.s32.totalorder %s28, 0
      %p70 = por %p68, %p69
      %p71 = scmp.ne.s32.totalorder %s59, %s60
      %p72 = scmp.eq.s32.totalorder %s29, 1
      %p73 = por %p71, %p72
      %p75 = scmp.ne.s32.totalorder %s60, %s74
      %p76 = scmp.eq.s32.totalorder %s29, 0
      %p77 = por %p75, %p76
      %s79 = sadd.s32 %s78, 1
      %p82 = scmp.eq.s32.totalorder %s23, 1
      %p83 = scmp.ne.s32.totalorder %s78, %s80
      %p84 = scmp.eq.s32.totalorder %s23, 0
      %p85 = por %p83, %p84
      %p86 = scmp.ne.s32.totalorder %s78, %s80
      %p87 = scmp.eq.s32.totalorder %s28, 1
      %p88 = por %p86, %p87
      %p89 = scmp.ne.s32.totalorder %s80, %s81
      %p90 = scmp.eq.s32.totalorder %s28, 0
      %p91 = por %p89, %p90
      %p92 = scmp.ne.s32.totalorder %s80, %s81
      %p93 = scmp.eq.s32.totalorder %s29, 1
      %p94 = por %p92, %p93
      %p96 = scmp.ne.s32.totalorder %s81, %s95
      %p97 = scmp.eq.s32.totalorder %s29, 0
      %p98 = por %p96, %p97
      %s100 = sadd.s32 %s99, 1
      %p103 = scmp.eq.s32.totalorder %s23, 1
      %p104 = scmp.ne.s32.totalorder %s99, %s101
      %p105 = scmp.eq.s32.totalorder %s23, 0
      %p106 = por %p104, %p105
      %p107 = scmp.ne.s32.totalorder %s99, %s101
      %p108 = scmp.eq.s32.totalorder %s28, 1
      %p109 = por %p107, %p108
      %p110 = scmp.ne.s32.totalorder %s101, %s102
      %p111 = scmp.eq.s32.totalorder %s28, 0
      %p112 = por %p110, %p111
      %p113 = scmp.ne.s32.totalorder %s101, %s102
      %p114 = scmp.eq.s32.totalorder %s29, 1
      %p115 = por %p113, %p114
      %p117 = scmp.ne.s32.totalorder %s102, %s116
      %p118 = scmp.eq.s32.totalorder %s29, 0
      %p119 = por %p117, %p118
      %s121 = sadd.s32 %s120, 1
      %p124 = scmp.eq.s32.totalorder %s23, 1
      %p125 = scmp.ne.s32.totalorder %s120, %s122
      %p126 = scmp.eq.s32.totalorder %s23, 0
      %p127 = por %p125, %p126
      %p128 = scmp.ne.s32.totalorder %s120, %s122
      %p129 = scmp.eq.s32.totalorder %s28, 1
      %p130 = por %p128, %p129
      %p131 = scmp.ne.s32.totalorder %s122, %s123
      %p132 = scmp.eq.s32.totalorder %s28, 0
      %p133 = por %p131, %p132
      %p134 = scmp.ne.s32.totalorder %s122, %s123
      %p135 = scmp.eq.s32.totalorder %s29, 1
      %p136 = por %p134, %p135
      %p138 = scmp.ne.s32.totalorder %s123, %s137
      %p139 = scmp.eq.s32.totalorder %s29, 0
      %p140 = por %p138, %p139
      %s141 = ssub.s32 %s23, %s30
      %p142 = scmp.eq.s32.totalorder %s141, 0
      %s144 = sadd.s32 %s143, 1
      %s145 = scalar_select %p142, %s143, %s144
      %p148 = pneg %p142
      %p149 = scmp.eq.s32.totalorder %s23, 1
      %p150 = por %p148, %p149
      %p151 = scmp.ne.s32.totalorder %s143, %s146
      %p152 = scmp.eq.s32.totalorder %s23, 0
      %p153 = por %p151, %p152
      %p154 = scmp.ne.s32.totalorder %s143, %s146
      %p155 = scmp.eq.s32.totalorder %s28, 1
      %p156 = por %p154, %p155
      %p157 = scmp.ne.s32.totalorder %s146, %s147
      %p158 = scmp.eq.s32.totalorder %s28, 0
      %p159 = por %p157, %p158
      %p160 = scmp.ne.s32.totalorder %s146, %s147
      %p161 = scmp.eq.s32.totalorder %s29, 1
      %p162 = por %p160, %p161
      %p164 = scmp.ne.s32.totalorder %s147, %s163
      %p165 = scmp.eq.s32.totalorder %s29, 0
      %p166 = por %p164, %p165
      %s167 = ssub.s32 %s23, %s30
      %p168 = scmp.eq.s32.totalorder %s167, 0
      %s170 = sadd.s32 %s169, 1
      %s171 = scalar_select %p168, %s169, %s170
      %p174 = pneg %p168
      %p175 = scmp.eq.s32.totalorder %s23, 1
      %p176 = por %p174, %p175
      %p177 = scmp.ne.s32.totalorder %s169, %s172
      %p178 = scmp.eq.s32.totalorder %s23, 0
      %p179 = por %p177, %p178
      %p180 = scmp.ne.s32.totalorder %s169, %s172
      %p181 = scmp.eq.s32.totalorder %s28, 1
      %p182 = por %p180, %p181
      %p183 = scmp.ne.s32.totalorder %s172, %s173
      %p184 = scmp.eq.s32.totalorder %s28, 0
      %p185 = por %p183, %p184
      %p186 = scmp.ne.s32.totalorder %s172, %s173
      %p187 = scmp.eq.s32.totalorder %s29, 1
      %p188 = por %p186, %p187
      %p190 = scmp.ne.s32.totalorder %s173, %s189
      %p191 = scmp.eq.s32.totalorder %s29, 0
      %p192 = por %p190, %p191
      %s193 = ssub.s32 %s23, %s30
      %p194 = scmp.eq.s32.totalorder %s193, 0
      %s196 = sadd.s32 %s195, 1
      %s197 = scalar_select %p194, %s195, %s196
      %p200 = pneg %p194
      %p201 = scmp.eq.s32.totalorder %s23, 1
      %p202 = por %p200, %p201
      %p203 = scmp.ne.s32.totalorder %s195, %s198
      %p204 = scmp.eq.s32.totalorder %s23, 0
      %p205 = por %p203, %p204
      %p206 = scmp.ne.s32.totalorder %s195, %s198
      %p207 = scmp.eq.s32.totalorder %s28, 1
      %p208 = por %p206, %p207
      %p209 = scmp.ne.s32.totalorder %s198, %s199
      %p210 = scmp.eq.s32.totalorder %s28, 0
      %p211 = por %p209, %p210
      %p212 = scmp.ne.s32.totalorder %s198, %s199
      %p213 = scmp.eq.s32.totalorder %s29, 1
      %p214 = por %p212, %p213
      %p216 = scmp.ne.s32.totalorder %s199, %s215
      %p217 = scmp.eq.s32.totalorder %s29, 0
      %p218 = por %p216, %p217
      %p219 = scmp.le.s32.totalorder 1, %s23
      %p220 = scmp.lt.s32.totalorder %s23, 3
      %p221 = pnand %p219, %p220
      %p222 = pneg %p221
      // Predicated region
      $region9: #{tpu_custom_call.1} parent=5 // pred_check
        _
      $region10: #{tpu_custom_call.1} parent=5 // pred_check_branch
        %224 = sbr.rel (%p221) target = $region12
      $region11: #{tpu_custom_call.1} parent=5 // pred_region
        %s225 = ssub.s32 %s23, 1
        // Predicated region
        $region13: #{tpu_custom_call.1} parent=11 // pred_check
          %p226 = pneg %p70
        $region14: #{tpu_custom_call.1} parent=11 // pred_check_branch
          %228 = sbr.rel (%p226) target = $region16
        $region15: #{tpu_custom_call.1} parent=11 // pred_region
          _
        $region16: #{tpu_custom_call.1} parent=11 // pred_fallthru
          _
        // Predicated region
        $region17: #{tpu_custom_call.1} parent=11 // pred_check
          %p229 = pneg %p91
        $region18: #{tpu_custom_call.1} parent=11 // pred_check_branch
          %231 = sbr.rel (%p229) target = $region20
        $region19: #{tpu_custom_call.1} parent=11 // pred_region
          _
        $region20: #{tpu_custom_call.1} parent=11 // pred_fallthru
          _
        // Predicated region
        $region21: #{tpu_custom_call.1} parent=11 // pred_check
          %p232 = pneg %p112
        $region22: #{tpu_custom_call.1} parent=11 // pred_check_branch
          %234 = sbr.rel (%p232) target = $region24
        $region23: #{tpu_custom_call.1} parent=11 // pred_region
          _
        $region24: #{tpu_custom_call.1} parent=11 // pred_fallthru
          _
        // Predicated region
        $region25: #{tpu_custom_call.1} parent=11 // pred_check
          %p235 = pneg %p133
        $region26: #{tpu_custom_call.1} parent=11 // pred_check_branch
          %237 = sbr.rel (%p235) target = $region28
        $region27: #{tpu_custom_call.1} parent=11 // pred_region
          _
        $region28: #{tpu_custom_call.1} parent=11 // pred_fallthru
          _
      $region12: #{tpu_custom_call.1} parent=5 // pred_fallthru
        _
      %p238 = scmp.lt.s32.totalorder %s23, 2
      // Predicated region
      $region29: #{tpu_custom_call.1} parent=5 // pred_check
        %p239 = pneg %p238
      $region30: #{tpu_custom_call.1} parent=5 // pred_check_branch
        %241 = sbr.rel (%p239) target = $region32
      $region31: #{tpu_custom_call.1} parent=5 // pred_region
        // Predicated region
        $region33: #{tpu_custom_call.1} parent=31 // pred_check
          %p242 = pneg %p43
        $region34: #{tpu_custom_call.1} parent=31 // pred_check_branch
          %244 = sbr.rel (%p242) target = $region36
        $region35: #{tpu_custom_call.1} parent=31 // pred_region
          %s245 = sand.u32 %s33, 1
          %s246 = scalar_lea.sflag [#allocation3], %s245
          %s247 = sand.u32 %s33, 1
          %s248 = smul.addr %s247, 256
          %s249 = scalar_lea.vmem [#allocation2], %s248
          %s251 = ssub.s32 4096, 4096
          %252 = vsyncadd %s246, %s251
          %s253 = smul.addr %s23, 32
          %s254 = smul.addr %s253, 128
          %s255 = scalar_lea.hbm %s0, %s254
          %s256 = sshll.u32 %s249, 4
          %s257 = int_to_ptr.vmem [resolvable:$true] %s256
          %262 = dma.hbm_to_vmem [thread:$0]  %s255, 4096, %s257, %s246, 256, 256, 16
        $region36: #{tpu_custom_call.1} parent=31 // pred_fallthru
          _
      $region32: #{tpu_custom_call.1} parent=5 // pred_fallthru
        _
      %p263 = scmp.le.s32.totalorder 1, %s23
      %p264 = scmp.lt.s32.totalorder %s23, 3
      %p265 = pnand %p263, %p264
      %p266 = pneg %p265
      // Predicated region
      $region37: #{tpu_custom_call.1} parent=5 // pred_check
        _
      $region38: #{tpu_custom_call.1} parent=5 // pred_check_branch
        %268 = sbr.rel (%p265) target = $region40
      $region39: #{tpu_custom_call.1} parent=5 // pred_region
        %s269 = ssub.s32 %s23, 1
        %s270 = sand.u32 %s36, 1
        %s271 = scalar_lea.sflag [#allocation3], %s270
        %s272 = sand.u32 %s36, 1
        %s273 = smul.addr %s272, 256
        %s274 = scalar_lea.vmem [#allocation2], %s273
        // Predicated region
        $region41: #{tpu_custom_call.1} parent=39 // pred_check
          %p275 = pneg %p49
        $region42: #{tpu_custom_call.1} parent=39 // pred_check_branch
          %277 = sbr.rel (%p275) target = $region44
        $region43: #{tpu_custom_call.1} parent=39 // pred_region
          %278 = dma.done %s271, 4096
        $region44: #{tpu_custom_call.1} parent=39 // pred_fallthru
          _
        %s279 = sand.u32 %s36, 1
        %s280 = scalar_lea.sflag [#allocation3], %s279
        %s281 = sand.u32 %s36, 1
        %s282 = smul.addr %s281, 256
        %s283 = scalar_lea.vmem [#allocation2], %s282
        %p284 = pneg %p49
        %p285 = pneg %p46
        %p286 = pneg %p70
        %p287 = pneg %p67
        %p288 = pneg %p91
        %p289 = pneg %p88
        %p290 = pneg %p112
        %p291 = pneg %p109
        %p292 = pneg %p133
        %p293 = pneg %p130
        %p294 = pneg %p159
        %p295 = pneg %p156
        %s296 = sand.u32 %s146, 1
        %s297 = scalar_lea.sflag [#allocation4], %s296
        %s298 = sand.u32 %s146, 1
        %s299 = smul.addr %s298, 256
        %s300 = scalar_lea.vmem [#allocation5], %s299
        %p301 = pneg %p185
        %p302 = pneg %p182
        %s303 = sand.u32 %s172, 1
        %s304 = scalar_lea.sflag [#allocation7], %s303
        %s305 = sand.u32 %s172, 1
        %s306 = smul.addr %s305, 256
        %s307 = scalar_lea.vmem [#allocation6], %s306
        %p308 = pneg %p211
        %p309 = pneg %p208
        %p310 = scmp.lt.s32.totalorder %s28, 1
        %s311 = scalar_select %p310, %s28, 1
        %s312 = smul.addr %s311, 16
        %s313 = smul.addr %s312, 8
        %s314 = scalar_lea.vmem %s7, %s313
        %p315 = scmp.lt.s32.totalorder %s28, 1
        %s316 = scalar_select %p315, %s28, 1
        %s317 = smul.addr %s316, 16
        %s318 = smul.addr %s317, 8
        %s319 = scalar_lea.vmem %s7, %s318
        %v320 = vld [vmem:[%s274] sm:$0xff]
        %v321 = vld [vmem:[%s274 + $0x8] sm:$0xff]
        %v322 = vld [vmem:[%s274 + $0x10] sm:$0xff]
        %v323 = vld [vmem:[%s274 + $0x18] sm:$0xff]
        %v324 = vld [vmem:[%s274 + $0x20] sm:$0xff]
        %v325 = vld [vmem:[%s274 + $0x28] sm:$0xff]
        %v326 = vld [vmem:[%s274 + $0x30] sm:$0xff]
        %v327 = vld [vmem:[%s274 + $0x38] sm:$0xff]
        %v328 = vld [vmem:[%s274 + $0x40] sm:$0xff]
        %v329 = vld [vmem:[%s274 + $0x48] sm:$0xff]
        %v330 = vld [vmem:[%s274 + $0x50] sm:$0xff]
        %v331 = vld [vmem:[%s274 + $0x58] sm:$0xff]
        %v332 = vld [vmem:[%s274 + $0x60] sm:$0xff]
        %v333 = vld [vmem:[%s274 + $0x68] sm:$0xff]
        %v334 = vld [vmem:[%s274 + $0x70] sm:$0xff]
        %v335 = vld [vmem:[%s274 + $0x78] sm:$0xff]
        %v336 = vld [vmem:[%s274 + $0x80] sm:$0xff]
        %v337 = vld [vmem:[%s274 + $0x88] sm:$0xff]
        %v338 = vld [vmem:[%s274 + $0x90] sm:$0xff]
        %v339 = vld [vmem:[%s274 + $0x98] sm:$0xff]
        %v340 = vld [vmem:[%s274 + $0xa0] sm:$0xff]
        %v341 = vld [vmem:[%s274 + $0xa8] sm:$0xff]
        %v342 = vld [vmem:[%s274 + $0xb0] sm:$0xff]
        %v343 = vld [vmem:[%s274 + $0xb8] sm:$0xff]
        %v344 = vld [vmem:[%s274 + $0xc0] sm:$0xff]
        %v345 = vld [vmem:[%s274 + $0xc8] sm:$0xff]
        %v346 = vld [vmem:[%s274 + $0xd0] sm:$0xff]
        %v347 = vld [vmem:[%s274 + $0xd8] sm:$0xff]
        %v348 = vld [vmem:[%s274 + $0xe0] sm:$0xff]
        %v349 = vld [vmem:[%s274 + $0xe8] sm:$0xff]
        %v350 = vld [vmem:[%s274 + $0xf0] sm:$0xff]
        %v351 = vld [vmem:[%s274 + $0xf8] sm:$0xff]
        %v352 = vadd.f32 %v320, %v321
        %353 = vadd.xlane.f32.xlu0 %v352
        %v354 = vpop.xlane.xlu0 %353
        %v355 = vadd.f32 %v322, %v323
        %356 = vadd.xlane.f32.xlu0 %v355
        %v357 = vpop.xlane.xlu0 %356
        %v358 = vadd.f32 %v324, %v325
        %359 = vadd.xlane.f32.xlu0 %v358
        %v360 = vpop.xlane.xlu0 %359
        %v361 = vadd.f32 %v326, %v327
        %362 = vadd.xlane.f32.xlu0 %v361
        %v363 = vpop.xlane.xlu0 %362
        %v364 = vadd.f32 %v328, %v329
        %365 = vadd.xlane.f32.xlu0 %v364
        %v366 = vpop.xlane.xlu0 %365
        %v367 = vadd.f32 %v330, %v331
        %368 = vadd.xlane.f32.xlu0 %v367
        %v369 = vpop.xlane.xlu0 %368
        %v370 = vadd.f32 %v332, %v333
        %371 = vadd.xlane.f32.xlu0 %v370
        %v372 = vpop.xlane.xlu0 %371
        %v373 = vadd.f32 %v334, %v335
        %374 = vadd.xlane.f32.xlu0 %v373
        %v375 = vpop.xlane.xlu0 %374
        %v376 = vadd.f32 %v336, %v337
        %377 = vadd.xlane.f32.xlu0 %v376
        %v378 = vpop.xlane.xlu0 %377
        %v379 = vadd.f32 %v338, %v339
        %380 = vadd.xlane.f32.xlu0 %v379
        %v381 = vpop.xlane.xlu0 %380
        %v382 = vadd.f32 %v340, %v341
        %383 = vadd.xlane.f32.xlu0 %v382
        %v384 = vpop.xlane.xlu0 %383
        %v385 = vadd.f32 %v342, %v343
        %386 = vadd.xlane.f32.xlu0 %v385
        %v387 = vpop.xlane.xlu0 %386
        %v388 = vadd.f32 %v344, %v345
        %389 = vadd.xlane.f32.xlu0 %v388
        %v390 = vpop.xlane.xlu0 %389
        %v391 = vadd.f32 %v346, %v347
        %392 = vadd.xlane.f32.xlu0 %v391
        %v393 = vpop.xlane.xlu0 %392
        %v394 = vadd.f32 %v348, %v349
        %395 = vadd.xlane.f32.xlu0 %v394
        %v396 = vpop.xlane.xlu0 %395
        %v397 = vadd.f32 %v350, %v351
        %398 = vadd.xlane.f32.xlu0 %v397
        %v399 = vpop.xlane.xlu0 %398
        %v400 = vmul.f32 %v354, 0.00390625
        %v401 = vmul.f32 %v357, 0.00390625
        %v402 = vmul.f32 %v360, 0.00390625
        %v403 = vmul.f32 %v363, 0.00390625
        %v404 = vmul.f32 %v366, 0.00390625
        %v405 = vmul.f32 %v369, 0.00390625
        %v406 = vmul.f32 %v372, 0.00390625
        %v407 = vmul.f32 %v375, 0.00390625
        %v408 = vmul.f32 %v378, 0.00390625
        %v409 = vmul.f32 %v381, 0.00390625
        %v410 = vmul.f32 %v384, 0.00390625
        %v411 = vmul.f32 %v387, 0.00390625
        %v412 = vmul.f32 %v390, 0.00390625
        %v413 = vmul.f32 %v393, 0.00390625
        %v414 = vmul.f32 %v396, 0.00390625
        %v415 = vmul.f32 %v399, 0.00390625
        %v416 = vld [vmem:[%s1] sm:$0xff]
        %v417 = vld [vmem:[%s1 + $0x8] sm:$0xff]
        %v418 = vld [vmem:[%s1 + $0x10] sm:$0xff]
        %v419 = vld [vmem:[%s1 + $0x18] sm:$0xff]
        %v420 = vld [vmem:[%s1 + $0x20] sm:$0xff]
        %v421 = vld [vmem:[%s1 + $0x28] sm:$0xff]
        %v422 = vld [vmem:[%s1 + $0x30] sm:$0xff]
        %v423 = vld [vmem:[%s1 + $0x38] sm:$0xff]
        %v424 = vld [vmem:[%s1 + $0x40] sm:$0xff]
        %v425 = vld [vmem:[%s1 + $0x48] sm:$0xff]
        %v426 = vld [vmem:[%s1 + $0x50] sm:$0xff]
        %v427 = vld [vmem:[%s1 + $0x58] sm:$0xff]
        %v428 = vld [vmem:[%s1 + $0x60] sm:$0xff]
        %v429 = vld [vmem:[%s1 + $0x68] sm:$0xff]
        %v430 = vld [vmem:[%s1 + $0x70] sm:$0xff]
        %v431 = vld [vmem:[%s1 + $0x78] sm:$0xff]
        %v432 = vld [vmem:[%s2] sm:$0x1]
        %v433 = vld [vmem:[%s3] sm:$0xff]
        %v434 = vld [vmem:[%s3 + $0x8] sm:$0xff]
        %v435 = vld [vmem:[%s3 + $0x10] sm:$0xff]
        %v436 = vld [vmem:[%s3 + $0x18] sm:$0xff]
        %v437 = vld [vmem:[%s3 + $0x20] sm:$0xff]
        %v438 = vld [vmem:[%s3 + $0x28] sm:$0xff]
        %v439 = vld [vmem:[%s3 + $0x30] sm:$0xff]
        %v440 = vld [vmem:[%s3 + $0x38] sm:$0xff]
        %v441 = vld [vmem:[%s3 + $0x40] sm:$0xff]
        %v442 = vld [vmem:[%s3 + $0x48] sm:$0xff]
        %v443 = vld [vmem:[%s3 + $0x50] sm:$0xff]
        %v444 = vld [vmem:[%s3 + $0x58] sm:$0xff]
        %v445 = vld [vmem:[%s3 + $0x60] sm:$0xff]
        %v446 = vld [vmem:[%s3 + $0x68] sm:$0xff]
        %v447 = vld [vmem:[%s3 + $0x70] sm:$0xff]
        %v448 = vld [vmem:[%s3 + $0x78] sm:$0xff]
        %v449 = vld [vmem:[%s4] sm:$0xff]
        %v450 = vld [vmem:[%s4 + $0x8] sm:$0xff]
        %v451 = vld [vmem:[%s4 + $0x10] sm:$0xff]
        %v452 = vld [vmem:[%s4 + $0x18] sm:$0xff]
        %v453 = vld [vmem:[%s4 + $0x20] sm:$0xff]
        %v454 = vld [vmem:[%s4 + $0x28] sm:$0xff]
        %v455 = vld [vmem:[%s4 + $0x30] sm:$0xff]
        %v456 = vld [vmem:[%s4 + $0x38] sm:$0xff]
        %v457 = vld [vmem:[%s4 + $0x40] sm:$0xff]
        %v458 = vld [vmem:[%s4 + $0x48] sm:$0xff]
        %v459 = vld [vmem:[%s4 + $0x50] sm:$0xff]
        %v460 = vld [vmem:[%s4 + $0x58] sm:$0xff]
        %v461 = vld [vmem:[%s4 + $0x60] sm:$0xff]
        %v462 = vld [vmem:[%s4 + $0x68] sm:$0xff]
        %v463 = vld [vmem:[%s4 + $0x70] sm:$0xff]
        %v464 = vld [vmem:[%s4 + $0x78] sm:$0xff]
        %v465 = vmul.f32 %v416, %v400
        %v466 = vmul.f32 %v417, %v401
        %v467 = vmul.f32 %v418, %v402
        %v468 = vmul.f32 %v419, %v403
        %v469 = vmul.f32 %v420, %v404
        %v470 = vmul.f32 %v421, %v405
        %v471 = vmul.f32 %v422, %v406
        %v472 = vmul.f32 %v423, %v407
        %v473 = vmul.f32 %v424, %v408
        %v474 = vmul.f32 %v425, %v409
        %v475 = vmul.f32 %v426, %v410
        %v476 = vmul.f32 %v427, %v411
        %v477 = vmul.f32 %v428, %v412
        %v478 = vmul.f32 %v429, %v413
        %v479 = vmul.f32 %v430, %v414
        %v480 = vmul.f32 %v431, %v415
        %vm481 = vcmask 64512
        %v482 = vsel %vm481, %v465, 0.0
        %v483 = vsel %vm481, %v466, 0.0
        %v484 = vadd.f32 %v482, %v483
        %v485 = vsel %vm481, %v467, 0.0
        %v486 = vadd.f32 %v484, %v485
        %v487 = vsel %vm481, %v468, 0.0
        %v488 = vadd.f32 %v486, %v487
        %v489 = vsel %vm481, %v469, 0.0
        %v490 = vadd.f32 %v488, %v489
        %v491 = vsel %vm481, %v470, 0.0
        %v492 = vadd.f32 %v490, %v491
        %v493 = vsel %vm481, %v471, 0.0
        %v494 = vadd.f32 %v492, %v493
        %v495 = vsel %vm481, %v472, 0.0
        %v496 = vadd.f32 %v494, %v495
        %v497 = vsel %vm481, %v473, 0.0
        %v498 = vadd.f32 %v496, %v497
        %v499 = vsel %vm481, %v474, 0.0
        %v500 = vadd.f32 %v498, %v499
        %v501 = vsel %vm481, %v475, 0.0
        %v502 = vadd.f32 %v500, %v501
        %v503 = vsel %vm481, %v476, 0.0
        %v504 = vadd.f32 %v502, %v503
        %v505 = vsel %vm481, %v477, 0.0
        %v506 = vadd.f32 %v504, %v505
        %v507 = vsel %vm481, %v478, 0.0
        %v508 = vadd.f32 %v506, %v507
        %v509 = vsel %vm481, %v479, 0.0
        %v510 = vadd.f32 %v508, %v509
        %v511 = vsel %vm481, %v480, 0.0
        %v512 = vadd.f32 %v510, %v511
        %v513 = vrot.slane %v512, 4
        %v514 = vadd.f32 %v512, %v513
        %v515 = vrot.slane %v514, 2
        %v516 = vadd.f32 %v514, %v515
        %v517 = vrot.slane %v516, 1
        %v518 = vadd.f32 %v516, %v517
        %v519 = vadd.f32 %v518, %v432
        %v520 = vmax.f32 %v519, 0.0
        %v521 = vlaneseq
        %v522 = vshrl.u32 %v521, 7
        %v523 = vsub.s32 0, %v522
        %v524 = vrot.slane %v520, %v523
        %v525 = vmul.f32 %v433, %v524
        %v526 = vmul.f32 %v434, %v524
        %v527 = vmul.f32 %v435, %v524
        %v528 = vmul.f32 %v436, %v524
        %v529 = vmul.f32 %v437, %v524
        %v530 = vmul.f32 %v438, %v524
        %v531 = vmul.f32 %v439, %v524
        %v532 = vmul.f32 %v440, %v524
        %v533 = vmul.f32 %v441, %v524
        %v534 = vmul.f32 %v442, %v524
        %v535 = vmul.f32 %v443, %v524
        %v536 = vmul.f32 %v444, %v524
        %v537 = vmul.f32 %v445, %v524
        %v538 = vmul.f32 %v446, %v524
        %v539 = vmul.f32 %v447, %v524
        %v540 = vmul.f32 %v448, %v524
        %v541 = vsel %vm481, %v525, 0.0
        %542 = vadd.xlane.f32.xlu0 %v541
        %v543 = vpop.xlane.xlu0 %542
        %v544 = vsel %vm481, %v526, 0.0
        %545 = vadd.xlane.f32.xlu0 %v544
        %v546 = vpop.xlane.xlu0 %545
        %v547 = vsel %vm481, %v527, 0.0
        %548 = vadd.xlane.f32.xlu0 %v547
        %v549 = vpop.xlane.xlu0 %548
        %v550 = vsel %vm481, %v528, 0.0
        %551 = vadd.xlane.f32.xlu0 %v550
        %v552 = vpop.xlane.xlu0 %551
        %v553 = vsel %vm481, %v529, 0.0
        %554 = vadd.xlane.f32.xlu0 %v553
        %v555 = vpop.xlane.xlu0 %554
        %v556 = vsel %vm481, %v530, 0.0
        %557 = vadd.xlane.f32.xlu0 %v556
        %v558 = vpop.xlane.xlu0 %557
        %v559 = vsel %vm481, %v531, 0.0
        %560 = vadd.xlane.f32.xlu0 %v559
        %v561 = vpop.xlane.xlu0 %560
        %v562 = vsel %vm481, %v532, 0.0
        %563 = vadd.xlane.f32.xlu0 %v562
        %v564 = vpop.xlane.xlu0 %563
        %v565 = vsel %vm481, %v533, 0.0
        %566 = vadd.xlane.f32.xlu0 %v565
        %v567 = vpop.xlane.xlu0 %566
        %v568 = vsel %vm481, %v534, 0.0
        %569 = vadd.xlane.f32.xlu0 %v568
        %v570 = vpop.xlane.xlu0 %569
        %v571 = vsel %vm481, %v535, 0.0
        %572 = vadd.xlane.f32.xlu0 %v571
        %v573 = vpop.xlane.xlu0 %572
        %v574 = vsel %vm481, %v536, 0.0
        %575 = vadd.xlane.f32.xlu0 %v574
        %v576 = vpop.xlane.xlu0 %575
        %v577 = vsel %vm481, %v537, 0.0
        %578 = vadd.xlane.f32.xlu0 %v577
        %v579 = vpop.xlane.xlu0 %578
        %v580 = vsel %vm481, %v538, 0.0
        %581 = vadd.xlane.f32.xlu0 %v580
        %v582 = vpop.xlane.xlu0 %581
        %v583 = vsel %vm481, %v539, 0.0
        %584 = vadd.xlane.f32.xlu0 %v583
        %v585 = vpop.xlane.xlu0 %584
        %v586 = vsel %vm481, %v540, 0.0
        %587 = vadd.xlane.f32.xlu0 %v586
        %v588 = vpop.xlane.xlu0 %587
        %v589 = vadd.f32 %v543, %v449
        %v590 = vadd.f32 %v546, %v450
        %v591 = vadd.f32 %v549, %v451
        %v592 = vadd.f32 %v552, %v452
        %v593 = vadd.f32 %v555, %v453
        %v594 = vadd.f32 %v558, %v454
        %v595 = vadd.f32 %v561, %v455
        %v596 = vadd.f32 %v564, %v456
        %v597 = vadd.f32 %v567, %v457
        %v598 = vadd.f32 %v570, %v458
        %v599 = vadd.f32 %v573, %v459
        %v600 = vadd.f32 %v576, %v460
        %v601 = vadd.f32 %v579, %v461
        %v602 = vadd.f32 %v582, %v462
        %v603 = vadd.f32 %v585, %v463
        %v604 = vadd.f32 %v588, %v464
        %v605 = vxor.u32 %v589, 2147483648
        %v606 = vxor.u32 %v590, 2147483648
        %v607 = vxor.u32 %v591, 2147483648
        %v608 = vxor.u32 %v592, 2147483648
        %v609 = vxor.u32 %v593, 2147483648
        %v610 = vxor.u32 %v594, 2147483648
        %v611 = vxor.u32 %v595, 2147483648
        %v612 = vxor.u32 %v596, 2147483648
        %v613 = vxor.u32 %v597, 2147483648
        %v614 = vxor.u32 %v598, 2147483648
        %v615 = vxor.u32 %v599, 2147483648
        %v616 = vxor.u32 %v600, 2147483648
        %v617 = vxor.u32 %v601, 2147483648
        %v618 = vxor.u32 %v602, 2147483648
        %v619 = vxor.u32 %v603, 2147483648
        %v620 = vxor.u32 %v604, 2147483648
        %v621 = vmul.f32 %v605, 1.442695
        %v622 = vpow.pop %v621
        %v623 = vmul.f32 %v606, 1.442695
        %v624 = vpow.pop %v623
        %v625 = vmul.f32 %v607, 1.442695
        %v626 = vpow.pop %v625
        %v627 = vmul.f32 %v608, 1.442695
        %v628 = vpow.pop %v627
        %v629 = vmul.f32 %v609, 1.442695
        %v630 = vpow.pop %v629
        %v631 = vmul.f32 %v610, 1.442695
        %v632 = vpow.pop %v631
        %v633 = vmul.f32 %v611, 1.442695
        %v634 = vpow.pop %v633
        %v635 = vmul.f32 %v612, 1.442695
        %v636 = vpow.pop %v635
        %v637 = vmul.f32 %v613, 1.442695
        %v638 = vpow.pop %v637
        %v639 = vmul.f32 %v614, 1.442695
        %v640 = vpow.pop %v639
        %v641 = vmul.f32 %v615, 1.442695
        %v642 = vpow.pop %v641
        %v643 = vmul.f32 %v616, 1.442695
        %v644 = vpow.pop %v643
        %v645 = vmul.f32 %v617, 1.442695
        %v646 = vpow.pop %v645
        %v647 = vmul.f32 %v618, 1.442695
        %v648 = vpow.pop %v647
        %v649 = vmul.f32 %v619, 1.442695
        %v650 = vpow.pop %v649
        %v651 = vmul.f32 %v620, 1.442695
        %v652 = vpow.pop %v651
        %v653 = vadd.f32 %v622, 1.0
        %v654 = vadd.f32 %v624, 1.0
        %v655 = vadd.f32 %v626, 1.0
        %v656 = vadd.f32 %v628, 1.0
        %v657 = vadd.f32 %v630, 1.0
        %v658 = vadd.f32 %v632, 1.0
        %v659 = vadd.f32 %v634, 1.0
        %v660 = vadd.f32 %v636, 1.0
        %v661 = vadd.f32 %v638, 1.0
        %v662 = vadd.f32 %v640, 1.0
        %v663 = vadd.f32 %v642, 1.0
        %v664 = vadd.f32 %v644, 1.0
        %v665 = vadd.f32 %v646, 1.0
        %v666 = vadd.f32 %v648, 1.0
        %v667 = vadd.f32 %v650, 1.0
        %v668 = vadd.f32 %v652, 1.0
        %v669 = vrcp.pop %v653
        %v670 = vmul.f32 1.0, %v669
        %v671 = vrcp.pop %v654
        %v672 = vmul.f32 1.0, %v671
        %v673 = vrcp.pop %v655
        %v674 = vmul.f32 1.0, %v673
        %v675 = vrcp.pop %v656
        %v676 = vmul.f32 1.0, %v675
        %v677 = vrcp.pop %v657
        %v678 = vmul.f32 1.0, %v677
        %v679 = vrcp.pop %v658
        %v680 = vmul.f32 1.0, %v679
        %v681 = vrcp.pop %v659
        %v682 = vmul.f32 1.0, %v681
        %v683 = vrcp.pop %v660
        %v684 = vmul.f32 1.0, %v683
        %v685 = vrcp.pop %v661
        %v686 = vmul.f32 1.0, %v685
        %v687 = vrcp.pop %v662
        %v688 = vmul.f32 1.0, %v687
        %v689 = vrcp.pop %v663
        %v690 = vmul.f32 1.0, %v689
        %v691 = vrcp.pop %v664
        %v692 = vmul.f32 1.0, %v691
        %v693 = vrcp.pop %v665
        %v694 = vmul.f32 1.0, %v693
        %v695 = vrcp.pop %v666
        %v696 = vmul.f32 1.0, %v695
        %v697 = vrcp.pop %v667
        %v698 = vmul.f32 1.0, %v697
        %v699 = vrcp.pop %v668
        %v700 = vmul.f32 1.0, %v699
        %vm701 = vcmask 7168
        %702 = vst.msk [vmem:[%s319] sm:$0xff] %vm701, %v670
        %703 = vst.msk [vmem:[%s319 + $0x8] sm:$0xff] %vm701, %v672
        %704 = vst.msk [vmem:[%s319 + $0x10] sm:$0xff] %vm701, %v674
        %705 = vst.msk [vmem:[%s319 + $0x18] sm:$0xff] %vm701, %v676
        %706 = vst.msk [vmem:[%s319 + $0x20] sm:$0xff] %vm701, %v678
        %707 = vst.msk [vmem:[%s319 + $0x28] sm:$0xff] %vm701, %v680
        %708 = vst.msk [vmem:[%s319 + $0x30] sm:$0xff] %vm701, %v682
        %709 = vst.msk [vmem:[%s319 + $0x38] sm:$0xff] %vm701, %v684
        %710 = vst.msk [vmem:[%s319 + $0x40] sm:$0xff] %vm701, %v686
        %711 = vst.msk [vmem:[%s319 + $0x48] sm:$0xff] %vm701, %v688
        %712 = vst.msk [vmem:[%s319 + $0x50] sm:$0xff] %vm701, %v690
        %713 = vst.msk [vmem:[%s319 + $0x58] sm:$0xff] %vm701, %v692
        %714 = vst.msk [vmem:[%s319 + $0x60] sm:$0xff] %vm701, %v694
        %715 = vst.msk [vmem:[%s319 + $0x68] sm:$0xff] %vm701, %v696
        %716 = vst.msk [vmem:[%s319 + $0x70] sm:$0xff] %vm701, %v698
        %717 = vst.msk [vmem:[%s319 + $0x78] sm:$0xff] %vm701, %v700
        %719 = vset.pattern.permute.xlu0 0
        %720 = vperm.xlu0 %719, %v670
        %v721 = vpop.permute.xlu0 %720
        %724 = vset.pattern.permute.xlu0 0
        %725 = vperm.xlu0 %724, %v672
        %v726 = vpop.permute.xlu0 %725
        %729 = vset.pattern.permute.xlu0 0
        %730 = vperm.xlu0 %729, %v674
        %v731 = vpop.permute.xlu0 %730
        %734 = vset.pattern.permute.xlu0 0
        %735 = vperm.xlu0 %734, %v676
        %v736 = vpop.permute.xlu0 %735
        %739 = vset.pattern.permute.xlu0 0
        %740 = vperm.xlu0 %739, %v678
        %v741 = vpop.permute.xlu0 %740
        %744 = vset.pattern.permute.xlu0 0
        %745 = vperm.xlu0 %744, %v680
        %v746 = vpop.permute.xlu0 %745
        %749 = vset.pattern.permute.xlu0 0
        %750 = vperm.xlu0 %749, %v682
        %v751 = vpop.permute.xlu0 %750
        %754 = vset.pattern.permute.xlu0 0
        %755 = vperm.xlu0 %754, %v684
        %v756 = vpop.permute.xlu0 %755
        %759 = vset.pattern.permute.xlu0 0
        %760 = vperm.xlu0 %759, %v686
        %v761 = vpop.permute.xlu0 %760
        %764 = vset.pattern.permute.xlu0 0
        %765 = vperm.xlu0 %764, %v688
        %v766 = vpop.permute.xlu0 %765
        %769 = vset.pattern.permute.xlu0 0
        %770 = vperm.xlu0 %769, %v690
        %v771 = vpop.permute.xlu0 %770
        %774 = vset.pattern.permute.xlu0 0
        %775 = vperm.xlu0 %774, %v692
        %v776 = vpop.permute.xlu0 %775
        %779 = vset.pattern.permute.xlu0 0
        %780 = vperm.xlu0 %779, %v694
        %v781 = vpop.permute.xlu0 %780
        %784 = vset.pattern.permute.xlu0 0
        %785 = vperm.xlu0 %784, %v696
        %v786 = vpop.permute.xlu0 %785
        %789 = vset.pattern.permute.xlu0 0
        %790 = vperm.xlu0 %789, %v698
        %v791 = vpop.permute.xlu0 %790
        %794 = vset.pattern.permute.xlu0 0
        %795 = vperm.xlu0 %794, %v700
        %v796 = vpop.permute.xlu0 %795
        %v798 = vmul.f32 %v320, %v721
        %v799 = vmul.f32 %v321, %v721
        %v800 = vmul.f32 %v322, %v726
        %v801 = vmul.f32 %v323, %v726
        %v802 = vmul.f32 %v324, %v731
        %v803 = vmul.f32 %v325, %v731
        %v804 = vmul.f32 %v326, %v736
        %v805 = vmul.f32 %v327, %v736
        %v806 = vmul.f32 %v328, %v741
        %v807 = vmul.f32 %v329, %v741
        %v808 = vmul.f32 %v330, %v746
        %v809 = vmul.f32 %v331, %v746
        %v810 = vmul.f32 %v332, %v751
        %v811 = vmul.f32 %v333, %v751
        %v812 = vmul.f32 %v334, %v756
        %v813 = vmul.f32 %v335, %v756
        %v814 = vmul.f32 %v336, %v761
        %v815 = vmul.f32 %v337, %v761
        %v816 = vmul.f32 %v338, %v766
        %v817 = vmul.f32 %v339, %v766
        %v818 = vmul.f32 %v340, %v771
        %v819 = vmul.f32 %v341, %v771
        %v820 = vmul.f32 %v342, %v776
        %v821 = vmul.f32 %v343, %v776
        %v822 = vmul.f32 %v344, %v781
        %v823 = vmul.f32 %v345, %v781
        %v824 = vmul.f32 %v346, %v786
        %v825 = vmul.f32 %v347, %v786
        %v826 = vmul.f32 %v348, %v791
        %v827 = vmul.f32 %v349, %v791
        %v828 = vmul.f32 %v350, %v796
        %v829 = vmul.f32 %v351, %v796
        %830 = vst [vmem:[%s300] sm:$0xff] %v798
        %831 = vst [vmem:[%s300 + $0x8] sm:$0xff] %v799
        %832 = vst [vmem:[%s300 + $0x10] sm:$0xff] %v800
        %833 = vst [vmem:[%s300 + $0x18] sm:$0xff] %v801
        %834 = vst [vmem:[%s300 + $0x20] sm:$0xff] %v802
        %835 = vst [vmem:[%s300 + $0x28] sm:$0xff] %v803
        %836 = vst [vmem:[%s300 + $0x30] sm:$0xff] %v804
        %837 = vst [vmem:[%s300 + $0x38] sm:$0xff] %v805
        %838 = vst [vmem:[%s300 + $0x40] sm:$0xff] %v806
        %839 = vst [vmem:[%s300 + $0x48] sm:$0xff] %v807
        %840 = vst [vmem:[%s300 + $0x50] sm:$0xff] %v808
        %841 = vst [vmem:[%s300 + $0x58] sm:$0xff] %v809
        %842 = vst [vmem:[%s300 + $0x60] sm:$0xff] %v810
        %843 = vst [vmem:[%s300 + $0x68] sm:$0xff] %v811
        %844 = vst [vmem:[%s300 + $0x70] sm:$0xff] %v812
        %845 = vst [vmem:[%s300 + $0x78] sm:$0xff] %v813
        %846 = vst [vmem:[%s300 + $0x80] sm:$0xff] %v814
        %847 = vst [vmem:[%s300 + $0x88] sm:$0xff] %v815
        %848 = vst [vmem:[%s300 + $0x90] sm:$0xff] %v816
        %849 = vst [vmem:[%s300 + $0x98] sm:$0xff] %v817
        %850 = vst [vmem:[%s300 + $0xa0] sm:$0xff] %v818
        %851 = vst [vmem:[%s300 + $0xa8] sm:$0xff] %v819
        %852 = vst [vmem:[%s300 + $0xb0] sm:$0xff] %v820
        %853 = vst [vmem:[%s300 + $0xb8] sm:$0xff] %v821
        %854 = vst [vmem:[%s300 + $0xc0] sm:$0xff] %v822
        %855 = vst [vmem:[%s300 + $0xc8] sm:$0xff] %v823
        %856 = vst [vmem:[%s300 + $0xd0] sm:$0xff] %v824
        %857 = vst [vmem:[%s300 + $0xd8] sm:$0xff] %v825
        %858 = vst [vmem:[%s300 + $0xe0] sm:$0xff] %v826
        %859 = vst [vmem:[%s300 + $0xe8] sm:$0xff] %v827
        %860 = vst [vmem:[%s300 + $0xf0] sm:$0xff] %v828
        %861 = vst [vmem:[%s300 + $0xf8] sm:$0xff] %v829
        %v862 = vsub.f32 %v320, %v798
        %v863 = vsub.f32 %v321, %v799
        %v864 = vsub.f32 %v322, %v800
        %v865 = vsub.f32 %v323, %v801
        %v866 = vsub.f32 %v324, %v802
        %v867 = vsub.f32 %v325, %v803
        %v868 = vsub.f32 %v326, %v804
        %v869 = vsub.f32 %v327, %v805
        %v870 = vsub.f32 %v328, %v806
        %v871 = vsub.f32 %v329, %v807
        %v872 = vsub.f32 %v330, %v808
        %v873 = vsub.f32 %v331, %v809
        %v874 = vsub.f32 %v332, %v810
        %v875 = vsub.f32 %v333, %v811
        %v876 = vsub.f32 %v334, %v812
        %v877 = vsub.f32 %v335, %v813
        %v878 = vsub.f32 %v336, %v814
        %v879 = vsub.f32 %v337, %v815
        %v880 = vsub.f32 %v338, %v816
        %v881 = vsub.f32 %v339, %v817
        %v882 = vsub.f32 %v340, %v818
        %v883 = vsub.f32 %v341, %v819
        %v884 = vsub.f32 %v342, %v820
        %v885 = vsub.f32 %v343, %v821
        %v886 = vsub.f32 %v344, %v822
        %v887 = vsub.f32 %v345, %v823
        %v888 = vsub.f32 %v346, %v824
        %v889 = vsub.f32 %v347, %v825
        %v890 = vsub.f32 %v348, %v826
        %v891 = vsub.f32 %v349, %v827
        %v892 = vsub.f32 %v350, %v828
        %v893 = vsub.f32 %v351, %v829
        %894 = vst [vmem:[%s307] sm:$0xff] %v862
        %895 = vst [vmem:[%s307 + $0x8] sm:$0xff] %v863
        %896 = vst [vmem:[%s307 + $0x10] sm:$0xff] %v864
        %897 = vst [vmem:[%s307 + $0x18] sm:$0xff] %v865
        %898 = vst [vmem:[%s307 + $0x20] sm:$0xff] %v866
        %899 = vst [vmem:[%s307 + $0x28] sm:$0xff] %v867
        %900 = vst [vmem:[%s307 + $0x30] sm:$0xff] %v868
        %901 = vst [vmem:[%s307 + $0x38] sm:$0xff] %v869
        %902 = vst [vmem:[%s307 + $0x40] sm:$0xff] %v870
        %903 = vst [vmem:[%s307 + $0x48] sm:$0xff] %v871
        %904 = vst [vmem:[%s307 + $0x50] sm:$0xff] %v872
        %905 = vst [vmem:[%s307 + $0x58] sm:$0xff] %v873
        %906 = vst [vmem:[%s307 + $0x60] sm:$0xff] %v874
        %907 = vst [vmem:[%s307 + $0x68] sm:$0xff] %v875
        %908 = vst [vmem:[%s307 + $0x70] sm:$0xff] %v876
        %909 = vst [vmem:[%s307 + $0x78] sm:$0xff] %v877
        %910 = vst [vmem:[%s307 + $0x80] sm:$0xff] %v878
        %911 = vst [vmem:[%s307 + $0x88] sm:$0xff] %v879
        %912 = vst [vmem:[%s307 + $0x90] sm:$0xff] %v880
        %913 = vst [vmem:[%s307 + $0x98] sm:$0xff] %v881
        %914 = vst [vmem:[%s307 + $0xa0] sm:$0xff] %v882
        %915 = vst [vmem:[%s307 + $0xa8] sm:$0xff] %v883
        %916 = vst [vmem:[%s307 + $0xb0] sm:$0xff] %v884
        %917 = vst [vmem:[%s307 + $0xb8] sm:$0xff] %v885
        %918 = vst [vmem:[%s307 + $0xc0] sm:$0xff] %v886
        %919 = vst [vmem:[%s307 + $0xc8] sm:$0xff] %v887
        %920 = vst [vmem:[%s307 + $0xd0] sm:$0xff] %v888
        %921 = vst [vmem:[%s307 + $0xd8] sm:$0xff] %v889
        %922 = vst [vmem:[%s307 + $0xe0] sm:$0xff] %v890
        %923 = vst [vmem:[%s307 + $0xe8] sm:$0xff] %v891
        %924 = vst [vmem:[%s307 + $0xf0] sm:$0xff] %v892
        %925 = vst [vmem:[%s307 + $0xf8] sm:$0xff] %v893
        %s926 = sand.u32 %s146, 1
        %s927 = scalar_lea.sflag [#allocation4], %s926
        %s928 = sand.u32 %s146, 1
        %s929 = smul.addr %s928, 256
        %s930 = scalar_lea.vmem [#allocation5], %s929
        %s931 = sand.u32 %s172, 1
        %s932 = scalar_lea.sflag [#allocation7], %s931
        %s933 = sand.u32 %s172, 1
        %s934 = smul.addr %s933, 256
        %s935 = scalar_lea.vmem [#allocation6], %s934
        %p936 = scmp.lt.s32.totalorder %s28, 1
        %s937 = scalar_select %p936, %s28, 1
        %s938 = smul.addr %s937, 16
        %s939 = smul.addr %s938, 8
        %s940 = scalar_lea.vmem %s7, %s939
        // Predicated region
        $region45: #{tpu_custom_call.1} parent=39 // pred_check
          %p941 = pneg %p156
        $region46: #{tpu_custom_call.1} parent=39 // pred_check_branch
          %943 = sbr.rel (%p941) target = $region48
        $region47: #{tpu_custom_call.1} parent=39 // pred_region
          %s945 = ssub.s32 4096, 4096
          %946 = vsyncadd %s927, %s945
          %s947 = smul.addr %s28, 32
          %s948 = smul.addr %s947, 128
          %s949 = scalar_lea.hbm %s5, %s948
          %s950 = sshll.u32 %s930, 4
          %s951 = int_to_ptr.vmem [resolvable:$true] %s950
          %956 = dma.vmem_to_hbm [thread:$0]  %s951, 4096, %s949, %s927, 256, 256, 16
        $region48: #{tpu_custom_call.1} parent=39 // pred_fallthru
          _
        // Predicated region
        $region49: #{tpu_custom_call.1} parent=39 // pred_check
          %p957 = pneg %p182
        $region50: #{tpu_custom_call.1} parent=39 // pred_check_branch
          %959 = sbr.rel (%p957) target = $region52
        $region51: #{tpu_custom_call.1} parent=39 // pred_region
          %s961 = ssub.s32 4096, 4096
          %962 = vsyncadd %s932, %s961
          %s963 = smul.addr %s28, 32
          %s964 = smul.addr %s963, 128
          %s965 = scalar_lea.hbm %s6, %s964
          %s966 = sshll.u32 %s935, 4
          %s967 = int_to_ptr.vmem [resolvable:$true] %s966
          %972 = dma.vmem_to_hbm [thread:$0]  %s967, 4096, %s965, %s932, 256, 256, 16
        $region52: #{tpu_custom_call.1} parent=39 // pred_fallthru
          _
        // Predicated region
        $region53: #{tpu_custom_call.1} parent=39 // pred_check
          %p973 = pneg %p208
        $region54: #{tpu_custom_call.1} parent=39 // pred_check_branch
          %975 = sbr.rel (%p973) target = $region56
        $region55: #{tpu_custom_call.1} parent=39 // pred_region
          _
        $region56: #{tpu_custom_call.1} parent=39 // pred_fallthru
          _
      $region40: #{tpu_custom_call.1} parent=5 // pred_fallthru
        _
      %p976 = scmp.le.s32.totalorder 2, %s23
      // Predicated region
      $region57: #{tpu_custom_call.1} parent=5 // pred_check
        %p977 = pneg %p976
      $region58: #{tpu_custom_call.1} parent=5 // pred_check_branch
        %979 = sbr.rel (%p977) target = $region60
      $region59: #{tpu_custom_call.1} parent=5 // pred_region
        %s980 = ssub.s32 %s23, 2
        // Predicated region
        $region61: #{tpu_custom_call.1} parent=59 // pred_check
          %p981 = pneg %p162
        $region62: #{tpu_custom_call.1} parent=59 // pred_check_branch
          %983 = sbr.rel (%p981) target = $region64
        $region63: #{tpu_custom_call.1} parent=59 // pred_region
          %s984 = sand.u32 %s147, 1
          %s985 = scalar_lea.sflag [#allocation4], %s984
          %s986 = sand.u32 %s147, 1
          %s987 = smul.addr %s986, 256
          %s988 = scalar_lea.vmem [#allocation5], %s987
          %989 = dma.done %s985, 4096
        $region64: #{tpu_custom_call.1} parent=59 // pred_fallthru
          _
        // Predicated region
        $region65: #{tpu_custom_call.1} parent=59 // pred_check
          %p990 = pneg %p188
        $region66: #{tpu_custom_call.1} parent=59 // pred_check_branch
          %992 = sbr.rel (%p990) target = $region68
        $region67: #{tpu_custom_call.1} parent=59 // pred_region
          %s993 = sand.u32 %s173, 1
          %s994 = scalar_lea.sflag [#allocation7], %s993
          %s995 = sand.u32 %s173, 1
          %s996 = smul.addr %s995, 256
          %s997 = scalar_lea.vmem [#allocation6], %s996
          %998 = dma.done %s994, 4096
        $region68: #{tpu_custom_call.1} parent=59 // pred_fallthru
          _
        // Predicated region
        $region69: #{tpu_custom_call.1} parent=59 // pred_check
          %p999 = pneg %p214
        $region70: #{tpu_custom_call.1} parent=59 // pred_check_branch
          %1001 = sbr.rel (%p999) target = $region72
        $region71: #{tpu_custom_call.1} parent=59 // pred_region
          %p1002 = scmp.lt.s32.totalorder %s29, 1
          %s1003 = scalar_select %p1002, %s29, 1
          %s1004 = smul.addr %s1003, 16
          %s1005 = smul.addr %s1004, 8
          %s1006 = scalar_lea.vmem %s7, %s1005
        $region72: #{tpu_custom_call.1} parent=59 // pred_fallthru
          _
      $region60: #{tpu_custom_call.1} parent=5 // pred_fallthru
        _
    $region6: #{tpu_custom_call.1} parent=1 // loop_footer
      %s27 = sadd.s32 1, %s23
    $region7: #{tpu_custom_call.1} parent=1 // loop_footer_branch
      %22 = sbr.rel target = $region3
    $region8: #{tpu_custom_call.1} parent=1 // loop_exit
      _
    %1007 = vsyncpa [#allocation3], 1
    %s1008 = scalar_lea.sflag [#allocation3], 1
    %1009 = vsyncpa %s1008, 1
    %1010 = vsyncpa [#allocation4], 1
    %s1011 = scalar_lea.sflag [#allocation4], 1
    %1012 = vsyncpa %s1011, 1
    %1013 = vsyncpa [#allocation7], 1
    %s1014 = scalar_lea.sflag [#allocation7], 1
    %1015 = vsyncpa %s1014, 1

</llo_original>
